<compile_context>
chip_gen: v7x
topology: tpu7x:2x2x1
jax: 0.10.0
libtpu: 0.0.40
codegen_flags: <defaults>
</compile_context>

<pallas_src>
import jax
import jax.numpy as jnp
from jax import lax
from jax.experimental import pallas as pl
from jax.experimental.pallas import tpu as pltpu


# ------------------------------- kernel ------------------------------------


def _make_ca22_kernel(GC, HW, L, K):
    def kernel(x_ref, pool_ref, shift_ref, wblk_ref, bexp_ref, out_ref):
        # x_ref    : (GC, HW)     lane-dense input block (G folded samples)
        # pool_ref : (HW, L)      fused pooling matrix  [mean over W | mean over H]
        # shift_ref: (K, L, L)    per-tap shift matrices (pad + junction zeros baked in)
        # wblk_ref : (K, GC, GC)  per-tap block-diagonal Conv1d weight
        # bexp_ref : (L, 2*HW)    one-hot broadcast matrix (a_h over W, a_w over H)
        # out_ref  : (GC, HW)

        # Fused axis means via one MXU matmul (feeds from x_ref directly; no
        # long-lived upcast copy of the big block is kept around):
        #   z[:, :H] = mean over W (x_h),  z[:, H:] = mean over H (x_w)
        z = jnp.dot(x_ref[...], pool_ref[...],
                    preferred_element_type=jnp.float32)           # (GC, L)

        # Conv1d(C, C, K, pad=K//2, bias=False), batched over all folded
        # samples:  a = sum_k (W_k block-diag) @ z @ S_k.  S_k bakes in the
        # shift, the zero 'same' padding and the x_h/x_w junction mask, so
        # there is no pad/slice/where/concatenate in the kernel.
        a = None
        for k in range(K):                                        # static, K = 3
            mixed = jnp.dot(wblk_ref[k], z,
                            preferred_element_type=jnp.float32)   # (GC, L)
            tap = jnp.dot(mixed, shift_ref[k],
                          preferred_element_type=jnp.float32)     # (GC, L)
            a = tap if a is None else a + tap
        a = jax.nn.sigmoid(a)                                     # (GC, L) = [a_h | a_w]

        # Lane-dense broadcast of a_h over W and a_w over H, then outer product.
        r = jnp.dot(a, bexp_ref[...],
                    preferred_element_type=jnp.float32)           # (GC, 2*HW)
        y = r[:, :HW] * r[:, HW:]                                 # (GC, HW) attention map

        # Re-read x_ref for the final multiply (VMEM re-reads are cheap) and
        # store once, lane-dense.
        out_ref[...] = (x_ref[...].astype(jnp.float32) * y).astype(out_ref.dtype)

    return kernel


# ------------------------------- sizing ------------------------------------


def _tpu_params():
    """(vmem_capacity_bytes, mxu_rows, tensorcores_per_chip) — best effort."""
    vmem_bytes = 128 * 1024 * 1024
    mxu_rows = 256
    num_cores = 1
    try:
        info = pltpu.get_tpu_info()
        vmem_bytes = int(getattr(info, "vmem_capacity_bytes", vmem_bytes))
        num_cores = int(getattr(info, "num_cores", num_cores))
    except Exception:
        pass
    try:
        kind = jax.devices()[0].device_kind.lower()
        if any(t in kind for t in ("v2", "v3", "v4", "v5")):
            mxu_rows = 128                       # 128x128 MXUs
        if "7" in kind:                          # v7x: 2 TCs, 64 MiB VMEM per TC
            num_cores = max(num_cores, 2)
            vmem_bytes = min(vmem_bytes, 64 * 1024 * 1024)
    except Exception:
        pass
    return vmem_bytes, mxu_rows, num_cores


def _choose_samples_per_step(b, c, per_sample_bytes, vmem_bytes, mxu_rows, num_cores):
    """Fold G samples per grid step so the batched matmul M-dimension (G*C)
    approaches the MXU row count, within a generation-aware VMEM budget.
    The '>= num_cores grid steps' rule only applies when the chip has more
    than one TensorCore AND there is enough total work to be worth splitting.
    (Only divisors of b are considered; ragged batches fall back to G=1.)"""
    block_budget = max(vmem_bytes // 8, 2 << 20)   # ~8 MiB/block v7x, ~16 MiB v5e/v6e
    per_core_min_bytes = 256 << 10
    row_cap = max(mxu_rows, c)                     # bounds the block-diag conv weight
    best = 1
    for g in range(1, b + 1):
        if b % g:
            continue
        rows = g * c
        if rows > row_cap:
            continue
        if rows % 8 and g != b:                    # keep blocks sublane-aligned
            continue
        if g * per_sample_bytes > block_budget:
            continue
        if (num_cores > 1 and b // g < num_cores
                and b * per_sample_bytes >= num_cores * per_core_min_bytes):
            continue
        best = g
        if rows >= mxu_rows:                       # MXU rows filled — stop growing
            break
    return best


# ------------------------------- wrapper -----------------------------------


def ca22_forward(x, conv1_weight, *, samples_per_step=None):
    """x: (B, C, H, W); conv1_weight: (C, C, K) PyTorch Conv1d weight (no bias)."""
    b, c, h, w = x.shape
    if h != w:
        raise ValueError("CA22 requires square spatial input (h == w).")
    hw = h * w
    L = h + w
    K = conv1_weight.shape[-1]
    pad = K // 2
    itemsize = jnp.dtype(x.dtype).itemsize

    vmem_bytes, mxu_rows, num_cores = _tpu_params()
    per_sample_bytes = c * hw * itemsize
    if samples_per_step is None:
        G = _choose_samples_per_step(b, c, per_sample_bytes, vmem_bytes,
                                     mxu_rows, num_cores)
    else:
        G = samples_per_step
    assert b % G == 0, "samples_per_step must divide the batch"
    GC = G * c
    grid = (b // G,)

    # Lane-dense view of the input (free metadata reshape of contiguous NCHW).
    xr = x.reshape(b * c, hw)

    # ---- constants (tiny vs the data; built once outside the kernel) ------
    m = jnp.arange(hw)
    ii = m // w               # spatial row of flattened position
    jj = m % w                # spatial col of flattened position

    # Pooling matrix (HW, L): first H cols -> mean over W, last W cols -> mean over H.
    pool = jnp.zeros((hw, L), jnp.float32)
    pool = pool.at[m, ii].set(1.0 / w)
    pool = pool.at[m, h + jj].set(1.0 / h)

    # Per-tap shift matrices (L, L): (z @ S_k)[:, l] = z[:, l + (k - pad)] with the
    # zero 'same' padding and the x_h / x_w junction mask baked in (taps never mix
    # the two pooled segments).
    ls = jnp.arange(L)
    shifts = []
    for k in range(K):
        d = k - pad
        src = ls + d
        valid = (src >= 0) & (src < L) & ((src < h) == (ls < h))
        S = jnp.zeros((L, L), jnp.float32)
        S = S.at[jnp.clip(src, 0, L - 1), ls].set(valid.astype(jnp.float32))
        shifts.append(S)
    shift = jnp.stack(shifts)                                     # (K, L, L)

    # Per-tap block-diagonal Conv1d weight: wblk[k, g*C+o, g*C+i] = w[o, i, k].
    w_k = jnp.transpose(conv1_weight.astype(jnp.float32), (2, 0, 1))   # (K, C, C)
    wblk = jnp.zeros((K, GC, GC), jnp.float32)
    for g in range(G):
        wblk = wblk.at[:, g * c:(g + 1) * c, g * c:(g + 1) * c].set(w_k)

    # Broadcast matrix (L, 2*HW): r[:, :HW] = a_h broadcast over W,
    #                             r[:, HW:] = a_w broadcast over H.
    bexp = jnp.zeros((L, 2 * hw), jnp.float32)
    bexp = bexp.at[ii, m].set(1.0)
    bexp = bexp.at[h + jj, hw + m].set(1.0)

    const_bytes = 4 * (hw * L + K * L * L + K * GC * GC + L * 2 * hw)
    block_bytes = G * per_sample_bytes
    # x block + out block double-buffered, plus (double-buffered) constants.
    vmem_limit = int(min(max(4 * block_bytes + 2 * const_bytes + (4 << 20), 16 << 20),
                         vmem_bytes))

    # HBM-bound at scale (~16 flop/byte): a cost estimate lets XLA overlap
    # surrounding ops instead of serializing around an unknown-cost call.
    flops = (2 * b * c * hw * L              # pool matmul
             + 2 * K * b * c * GC * L        # block-diag channel mix
             + 2 * K * b * c * L * L         # tap shift matmuls
             + 2 * b * c * L * 2 * hw        # broadcast matmul
             + 3 * b * c * hw)               # attention outer product + apply
    cost = pl.CostEstimate(flops=int(flops),
                           transcendentals=int(b * c * L),
                           bytes_accessed=int(2 * b * c * hw * itemsize + const_bytes))

    kernel = _make_ca22_kernel(GC, hw, L, K)

    out = pl.pallas_call(
        kernel,
        out_shape=jax.ShapeDtypeStruct((b * c, hw), x.dtype),
        grid_spec=pltpu.PrefetchScalarGridSpec(
            num_scalar_prefetch=0,
            grid=grid,
            in_specs=[
                pl.BlockSpec((GC, hw), lambda i: (i, 0)),
                # Resident constants (constant block index). They total a few
                # hundred KiB at these sizes (and the demo runs a single grid
                # step), so default buffering is harmless; single-buffer them
                # only for very large spatial sizes where bexp grows quadratically.
                pl.BlockSpec((hw, L), lambda i: (0, 0)),
                pl.BlockSpec((K, L, L), lambda i: (0, 0, 0)),
                pl.BlockSpec((K, GC, GC), lambda i: (0, 0, 0)),
                pl.BlockSpec((L, 2 * hw), lambda i: (0, 0)),
            ],
            out_specs=pl.BlockSpec((GC, hw), lambda i: (i, 0)),
        ),
        compiler_params=pltpu.CompilerParams(
            dimension_semantics=("parallel",),
            vmem_limit_bytes=vmem_limit,
        ),
        cost_estimate=cost,
    )(xr, pool, shift, wblk, bexp)

    return out.reshape(b, c, h, w)


# --------------------------- pure-JAX reference -----------------------------


def ca22_reference(x, conv1_weight):
    b, c, h, w = x.shape
    k = conv1_weight.shape[-1]
    pad = k // 2

    def conv(z):
        return lax.conv_general_dilated(
            z, conv1_weight, window_strides=(1,), padding=[(pad, pad)],
            dimension_numbers=("NCH", "OIH", "NCH"),
            precision=lax.Precision.HIGHEST)

    x_h = jnp.mean(x, axis=3)                         # (b, c, h)
    x_w = jnp.mean(x, axis=2)                         # (b, c, w)  (h == w per module)
    a_h = jax.nn.sigmoid(conv(x_h))[:, :, :, None]    # (b, c, h, 1)
    a_w = jax.nn.sigmoid(conv(x_w))[:, :, None, :]    # (b, c, 1, w)
    return x * a_h * a_w


# --------------------------------- main -------------------------------------


if __name__ == "__main__":
    batch, channel, H, W = 2, 16, 16, 16
    ks1 = 3                                            # fixed by the module

    key = jax.random.PRNGKey(0)
    kx, kw = jax.random.split(key)
    x = jax.random.normal(kx, (batch, channel, H, W), dtype=jnp.float32)
    # PyTorch Conv1d weight layout: (out_channels, in_channels, kernel_size), no bias.
    w = 0.2 * jax.random.normal(kw, (channel, channel, ks1), dtype=jnp.float32)

    out = jax.block_until_ready(ca22_forward(x, w))
    ref = jax.block_until_ready(ca22_reference(x, w))

    assert out.shape == (batch, channel, H, W)
    max_err = float(jnp.max(jnp.abs(out - ref)))
    assert jnp.allclose(out, ref, rtol=1e-3, atol=1e-4), max_err

    print("KERNEL_OK")
</pallas_src>

<mosaic_0001>
module attributes {stable_mosaic.version = 11 : i64} {
  func.func @kernel(%arg0: i32, %arg1: memref<32x256xf32, #tpu.memory_space<vmem>>, %arg2: memref<256x32xf32, #tpu.memory_space<vmem>>, %arg3: memref<3x32x32xf32, #tpu.memory_space<vmem>>, %arg4: memref<3x32x32xf32, #tpu.memory_space<vmem>>, %arg5: memref<32x512xf32, #tpu.memory_space<vmem>>, %arg6: memref<32x256xf32, #tpu.memory_space<vmem>>) attributes {dimension_semantics = [#tpu.dimension_semantics<parallel>], iteration_bounds = array<i64: 1>, scalar_prefetch = 0 : i64, scratch_operands = 0 : i64, tpu.core_type = #tpu.core_type<tc>, window_params = [{transform_indices = @transform_0, window_bounds = array<i64: 32, 256>}, {pipeline_mode = #tpu.pipeline_mode<synchronous>, transform_indices = @transform_1, window_bounds = array<i64: 256, 32>}, {pipeline_mode = #tpu.pipeline_mode<synchronous>, transform_indices = @transform_2, window_bounds = array<i64: 3, 32, 32>}, {pipeline_mode = #tpu.pipeline_mode<synchronous>, transform_indices = @transform_3, window_bounds = array<i64: 3, 32, 32>}, {pipeline_mode = #tpu.pipeline_mode<synchronous>, transform_indices = @transform_4, window_bounds = array<i64: 32, 512>}, {transform_indices = @transform_5, window_bounds = array<i64: 32, 256>}]} {
    %c0 = arith.constant 0 : index
    %c0_0 = arith.constant 0 : index
    %0 = vector.load %arg1[%c0, %c0_0] : memref<32x256xf32, #tpu.memory_space<vmem>>, vector<32x256xf32>
    %c0_1 = arith.constant 0 : index
    %c0_2 = arith.constant 0 : index
    %1 = vector.load %arg2[%c0_1, %c0_2] : memref<256x32xf32, #tpu.memory_space<vmem>>, vector<256x32xf32>
    %cst = arith.constant dense<0.000000e+00> : vector<32x32xf32>
    %2 = tpu.matmul %0, %1, %cst {dimension_numbers = #tpu.dot_dimension_numbers<[1], [0], [0], [1], [0, 0, 1, 1], [], []>} : vector<32x256xf32>, vector<256x32xf32>, vector<32x32xf32> -> vector<32x32xf32>
    %c0_3 = arith.constant 0 : index
    %c0_4 = arith.constant 0 : index
    %c0_5 = arith.constant 0 : index
    %3 = vector.load %arg4[%c0_3, %c0_4, %c0_5] : memref<3x32x32xf32, #tpu.memory_space<vmem>>, vector<1x32x32xf32>
    %4 = vector.shape_cast %3 : vector<1x32x32xf32> to vector<32x32xf32>
    %cst_6 = arith.constant dense<0.000000e+00> : vector<32x32xf32>
    %5 = tpu.matmul %4, %2, %cst_6 {dimension_numbers = #tpu.dot_dimension_numbers<[1], [0], [0], [1], [0, 0, 1, 1], [], []>} : vector<32x32xf32>, vector<32x32xf32>, vector<32x32xf32> -> vector<32x32xf32>
    %c0_7 = arith.constant 0 : index
    %c0_8 = arith.constant 0 : index
    %c0_9 = arith.constant 0 : index
    %6 = vector.load %arg3[%c0_7, %c0_8, %c0_9] : memref<3x32x32xf32, #tpu.memory_space<vmem>>, vector<1x32x32xf32>
    %7 = vector.shape_cast %6 : vector<1x32x32xf32> to vector<32x32xf32>
    %cst_10 = arith.constant dense<0.000000e+00> : vector<32x32xf32>
    %8 = tpu.matmul %5, %7, %cst_10 {dimension_numbers = #tpu.dot_dimension_numbers<[1], [0], [0], [1], [0, 0, 1, 1], [], []>} : vector<32x32xf32>, vector<32x32xf32>, vector<32x32xf32> -> vector<32x32xf32>
    %c1 = arith.constant 1 : index
    %c0_11 = arith.constant 0 : index
    %c0_12 = arith.constant 0 : index
    %9 = vector.load %arg4[%c1, %c0_11, %c0_12] : memref<3x32x32xf32, #tpu.memory_space<vmem>>, vector<1x32x32xf32>
    %10 = vector.shape_cast %9 : vector<1x32x32xf32> to vector<32x32xf32>
    %cst_13 = arith.constant dense<0.000000e+00> : vector<32x32xf32>
    %11 = tpu.matmul %10, %2, %cst_13 {dimension_numbers = #tpu.dot_dimension_numbers<[1], [0], [0], [1], [0, 0, 1, 1], [], []>} : vector<32x32xf32>, vector<32x32xf32>, vector<32x32xf32> -> vector<32x32xf32>
    %c1_14 = arith.constant 1 : index
    %c0_15 = arith.constant 0 : index
    %c0_16 = arith.constant 0 : index
    %12 = vector.load %arg3[%c1_14, %c0_15, %c0_16] : memref<3x32x32xf32, #tpu.memory_space<vmem>>, vector<1x32x32xf32>
    %13 = vector.shape_cast %12 : vector<1x32x32xf32> to vector<32x32xf32>
    %cst_17 = arith.constant dense<0.000000e+00> : vector<32x32xf32>
    %14 = tpu.matmul %11, %13, %cst_17 {dimension_numbers = #tpu.dot_dimension_numbers<[1], [0], [0], [1], [0, 0, 1, 1], [], []>} : vector<32x32xf32>, vector<32x32xf32>, vector<32x32xf32> -> vector<32x32xf32>
    %15 = arith.addf %8, %14 : vector<32x32xf32>
    %c2 = arith.constant 2 : index
    %c0_18 = arith.constant 0 : index
    %c0_19 = arith.constant 0 : index
    %16 = vector.load %arg4[%c2, %c0_18, %c0_19] : memref<3x32x32xf32, #tpu.memory_space<vmem>>, vector<1x32x32xf32>
    %17 = vector.shape_cast %16 : vector<1x32x32xf32> to vector<32x32xf32>
    %cst_20 = arith.constant dense<0.000000e+00> : vector<32x32xf32>
    %18 = tpu.matmul %17, %2, %cst_20 {dimension_numbers = #tpu.dot_dimension_numbers<[1], [0], [0], [1], [0, 0, 1, 1], [], []>} : vector<32x32xf32>, vector<32x32xf32>, vector<32x32xf32> -> vector<32x32xf32>
    %c2_21 = arith.constant 2 : index
    %c0_22 = arith.constant 0 : index
    %c0_23 = arith.constant 0 : index
    %19 = vector.load %arg3[%c2_21, %c0_22, %c0_23] : memref<3x32x32xf32, #tpu.memory_space<vmem>>, vector<1x32x32xf32>
    %20 = vector.shape_cast %19 : vector<1x32x32xf32> to vector<32x32xf32>
    %cst_24 = arith.constant dense<0.000000e+00> : vector<32x32xf32>
    %21 = tpu.matmul %18, %20, %cst_24 {dimension_numbers = #tpu.dot_dimension_numbers<[1], [0], [0], [1], [0, 0, 1, 1], [], []>} : vector<32x32xf32>, vector<32x32xf32>, vector<32x32xf32> -> vector<32x32xf32>
    %22 = arith.addf %15, %21 : vector<32x32xf32>
    %23 = arith.negf %22 : vector<32x32xf32>
    %24 = math.exp %23 : vector<32x32xf32>
    %cst_25 = arith.constant 1.000000e+00 : f32
    %25 = vector.broadcast %cst_25 : f32 to vector<32x32xf32>
    %26 = arith.addf %25, %24 : vector<32x32xf32>
    %27 = arith.divf %25, %26 : vector<32x32xf32>
    %c0_26 = arith.constant 0 : index
    %c0_27 = arith.constant 0 : index
    %28 = vector.load %arg5[%c0_26, %c0_27] : memref<32x512xf32, #tpu.memory_space<vmem>>, vector<32x512xf32>
    %cst_28 = arith.constant dense<0.000000e+00> : vector<32x512xf32>
    %29 = tpu.matmul %27, %28, %cst_28 {dimension_numbers = #tpu.dot_dimension_numbers<[1], [0], [0], [1], [0, 0, 1, 1], [], []>} : vector<32x32xf32>, vector<32x512xf32>, vector<32x512xf32> -> vector<32x512xf32>
    %30 = vector.extract_strided_slice %29 {offsets = [0, 0], sizes = [32, 256], strides = [1, 1]} : vector<32x512xf32> to vector<32x256xf32>
    %31 = vector.extract_strided_slice %29 {offsets = [0, 256], sizes = [32, 256], strides = [1, 1]} : vector<32x512xf32> to vector<32x256xf32>
    %32 = arith.mulf %30, %31 : vector<32x256xf32>
    %c0_29 = arith.constant 0 : index
    %c0_30 = arith.constant 0 : index
    %33 = vector.load %arg1[%c0_29, %c0_30] : memref<32x256xf32, #tpu.memory_space<vmem>>, vector<32x256xf32>
    %34 = arith.mulf %33, %32 : vector<32x256xf32>
    %c0_31 = arith.constant 0 : index
    %c0_32 = arith.constant 0 : index
    %35 = vector.load %arg6[%c0_31, %c0_32] : memref<32x256xf32, #tpu.memory_space<vmem>>, vector<32x256xf32>
    tpu.vector_store %arg6[%c0_31, %c0_32], %34 {strides = array<i32>} : memref<32x256xf32, #tpu.memory_space<vmem>>, vector<32x256xf32>,
    return
  }
  func.func @transform_0(%arg0: i32) -> (i32, i32) {
    %c0_i32 = arith.constant 0 : i32
    %c0_i32_0 = arith.constant 0 : i32
    return %arg0, %c0_i32 : i32, i32
  }
  func.func @transform_1(%arg0: i32) -> (i32, i32) {
    %c0_i32 = arith.constant 0 : i32
    %c0_i32_0 = arith.constant 0 : i32
    %c0_i32_1 = arith.constant 0 : i32
    return %c0_i32, %c0_i32_0 : i32, i32
  }
  func.func @transform_2(%arg0: i32) -> (i32, i32, i32) {
    %c0_i32 = arith.constant 0 : i32
    %c0_i32_0 = arith.constant 0 : i32
    %c0_i32_1 = arith.constant 0 : i32
    %c0_i32_2 = arith.constant 0 : i32
    return %c0_i32, %c0_i32_0, %c0_i32_1 : i32, i32, i32
  }
  func.func @transform_3(%arg0: i32) -> (i32, i32, i32) {
    %c0_i32 = arith.constant 0 : i32
    %c0_i32_0 = arith.constant 0 : i32
    %c0_i32_1 = arith.constant 0 : i32
    %c0_i32_2 = arith.constant 0 : i32
    return %c0_i32, %c0_i32_0, %c0_i32_1 : i32, i32, i32
  }
  func.func @transform_4(%arg0: i32) -> (i32, i32) {
    %c0_i32 = arith.constant 0 : i32
    %c0_i32_0 = arith.constant 0 : i32
    %c0_i32_1 = arith.constant 0 : i32
    return %c0_i32, %c0_i32_0 : i32, i32
  }
  func.func @transform_5(%arg0: i32) -> (i32, i32) {
    %c0_i32 = arith.constant 0 : i32
    %c0_i32_0 = arith.constant 0 : i32
    return %arg0, %c0_i32 : i32, i32
  }
}

</mosaic_0001>

<llo_original>
// kernel: tpu_custom_call.1
$region0: #{tpu_custom_call.1}
  #allocation0 [shape = 'u32[]', space=smem, size = 0x4, offset = 0x4, fixed_abs, tag = 'smem constant byte address 0x4 - core index']
  #allocation1 [shape = 'u32[144,128]{1,0:T(1,128)}', space=vmem, size = 0x12000, scoped, tag = 'internal scratch']
  %s0 = inlined_call_operand.hbm [shape: f32[32,256], index: 0, kind: input, shape index: {}]
  %s1 = inlined_call_operand.vmem [shape: f32[256,32], index: 1, kind: input, shape index: {}]
  %s2 = inlined_call_operand.vmem [shape: f32[3,32,32], index: 2, kind: input, shape index: {}]
  %s3 = inlined_call_operand.vmem [shape: f32[3,32,32], index: 3, kind: input, shape index: {}]
  %s4 = inlined_call_operand.vmem [shape: f32[32,512], index: 4, kind: input, shape index: {}]
  %s5 = inlined_call_operand.hbm [shape: f32[32,256], index: 5, kind: output, shape index: {}]
  %s6 = sld [smem:[#allocation0]]
  $region34: #{tpu_custom_call.1} parent=0
    _
  %s8 = ssub.s32 1, %s6
  %s9 = scalar_select 0, %s8, %s6
  $region1: #{tpu_custom_call.1} parent=0
    #allocation2 [shape = 'u8[32768]{0}', space=vmem, size = 0x8000, scoped, tag = 'input window, operand 0, single buffered']
    #allocation3 [shape = 's32[1]{0}', space=sflag, size = 0x4, scoped, tag = 'scoped memory for tpu_custom_call.1']
    #allocation4 [shape = 's32[1]{0}', space=sflag, size = 0x4, scoped, tag = 'scoped memory for tpu_custom_call.1']
    #allocation5 [shape = 'u8[32768]{0}', space=vmem, size = 0x8000, scoped, tag = 'output window, operand 0, single buffered']
    %10 = vsyncpa [#allocation3], 0
    %11 = vsyncpa [#allocation4], 0
    // Predicated region
    $region2: #{tpu_custom_call.1} parent=1 // pred_check
      _
    $region3: #{tpu_custom_call.1} parent=1 // pred_check_branch
      %13 = sbr.rel (0) target = $region5
    $region4: #{tpu_custom_call.1} parent=1 // pred_region
      %s15 = ssub.s32 1024, 1024
      %16 = vsyncadd [#allocation3], %s15
      %s17 = sshll.u32 [#allocation2], 4
      %s18 = int_to_ptr.vmem [resolvable:$true] %s17
      %23 = dma.hbm_to_vmem [thread:$0]  %s0, 1024, %s18, [#allocation3], 256, 256, 16
    $region5: #{tpu_custom_call.1} parent=1 // pred_fallthru
      _
    // Predicated region
    $region6: #{tpu_custom_call.1} parent=1 // pred_check
      _
    $region7: #{tpu_custom_call.1} parent=1 // pred_check_branch
      %25 = sbr.rel (0) target = $region9
    $region8: #{tpu_custom_call.1} parent=1 // pred_region
      _
    $region9: #{tpu_custom_call.1} parent=1 // pred_fallthru
      _
    // Predicated region
    $region10: #{tpu_custom_call.1} parent=1 // pred_check
      _
    $region11: #{tpu_custom_call.1} parent=1 // pred_check_branch
      %27 = sbr.rel (0) target = $region13
    $region12: #{tpu_custom_call.1} parent=1 // pred_region
      _
    $region13: #{tpu_custom_call.1} parent=1 // pred_fallthru
      _
    // Predicated region
    $region14: #{tpu_custom_call.1} parent=1 // pred_check
      _
    $region15: #{tpu_custom_call.1} parent=1 // pred_check_branch
      %29 = sbr.rel (0) target = $region17
    $region16: #{tpu_custom_call.1} parent=1 // pred_region
      _
    $region17: #{tpu_custom_call.1} parent=1 // pred_fallthru
      _
    // Predicated region
    $region18: #{tpu_custom_call.1} parent=1 // pred_check
      _
    $region19: #{tpu_custom_call.1} parent=1 // pred_check_branch
      %31 = sbr.rel (0) target = $region21
    $region20: #{tpu_custom_call.1} parent=1 // pred_region
      _
    $region21: #{tpu_custom_call.1} parent=1 // pred_fallthru
      _
    // Predicated region
    $region22: #{tpu_custom_call.1} parent=1 // pred_check
      _
    $region23: #{tpu_custom_call.1} parent=1 // pred_check_branch
      %33 = sbr.rel (0) target = $region25
    $region24: #{tpu_custom_call.1} parent=1 // pred_region
      %34 = dma.done [#allocation3], 1024
    $region25: #{tpu_custom_call.1} parent=1 // pred_fallthru
      _
    %v35 = vld [vmem:[#allocation2] sm:$0xff]
    %v36 = vld [vmem:[#allocation2 + $0x8] sm:$0xff]
    %v37 = vld [vmem:[#allocation2 + $0x10] sm:$0xff]
    %v38 = vld [vmem:[#allocation2 + $0x18] sm:$0xff]
    %v39 = vld [vmem:[#allocation2 + $0x20] sm:$0xff]
    %v40 = vld [vmem:[#allocation2 + $0x28] sm:$0xff]
    %v41 = vld [vmem:[#allocation2 + $0x30] sm:$0xff]
    %v42 = vld [vmem:[#allocation2 + $0x38] sm:$0xff]
    %v43 = vld [vmem:[%s1] sm:$0xff]
    %v44 = vld [vmem:[%s1 + $0x8] sm:$0xff]
    %v45 = vld [vmem:[%s1 + $0x10] sm:$0xff]
    %v46 = vld [vmem:[%s1 + $0x18] sm:$0xff]
    %v47 = vld [vmem:[%s1 + $0x20] sm:$0xff]
    %v48 = vld [vmem:[%s1 + $0x28] sm:$0xff]
    %v49 = vld [vmem:[%s1 + $0x30] sm:$0xff]
    %v50 = vld [vmem:[%s1 + $0x38] sm:$0xff]
    %v51 = vld [vmem:[%s1 + $0x40] sm:$0xff]
    %v52 = vld [vmem:[%s1 + $0x48] sm:$0xff]
    %v53 = vld [vmem:[%s1 + $0x50] sm:$0xff]
    %v54 = vld [vmem:[%s1 + $0x58] sm:$0xff]
    %v55 = vld [vmem:[%s1 + $0x60] sm:$0xff]
    %v56 = vld [vmem:[%s1 + $0x68] sm:$0xff]
    %v57 = vld [vmem:[%s1 + $0x70] sm:$0xff]
    %v58 = vld [vmem:[%s1 + $0x78] sm:$0xff]
    %v59 = vld [vmem:[%s1 + $0x80] sm:$0xff]
    %v60 = vld [vmem:[%s1 + $0x88] sm:$0xff]
    %v61 = vld [vmem:[%s1 + $0x90] sm:$0xff]
    %v62 = vld [vmem:[%s1 + $0x98] sm:$0xff]
    %v63 = vld [vmem:[%s1 + $0xa0] sm:$0xff]
    %v64 = vld [vmem:[%s1 + $0xa8] sm:$0xff]
    %v65 = vld [vmem:[%s1 + $0xb0] sm:$0xff]
    %v66 = vld [vmem:[%s1 + $0xb8] sm:$0xff]
    %v67 = vld [vmem:[%s1 + $0xc0] sm:$0xff]
    %v68 = vld [vmem:[%s1 + $0xc8] sm:$0xff]
    %v69 = vld [vmem:[%s1 + $0xd0] sm:$0xff]
    %v70 = vld [vmem:[%s1 + $0xd8] sm:$0xff]
    %v71 = vld [vmem:[%s1 + $0xe0] sm:$0xff]
    %v72 = vld [vmem:[%s1 + $0xe8] sm:$0xff]
    %v73 = vld [vmem:[%s1 + $0xf0] sm:$0xff]
    %v74 = vld [vmem:[%s1 + $0xf8] sm:$0xff]
    %75 = vmatprep.subr.mxu0 0.0
    %76 = vmatpush1.msra.mxu0 %v43
    %77 = vmatprep.subr.mxu0 0.0
    %78 = vmatpush1.msra.mxu0 %v44
    %79 = vmatprep.subr.mxu0 0.0
    %80 = vmatpush1.msra.mxu0 %v45
    %81 = vmatprep.subr.mxu0 0.0
    %82 = vmatpush1.msra.mxu0 %v46
    %83 = vmatprep.subr.mxu0 0.0
    %84 = vmatpush1.msra.mxu0 %v47
    %85 = vmatprep.subr.mxu0 0.0
    %86 = vmatpush1.msra.mxu0 %v48
    %87 = vmatprep.subr.mxu0 0.0
    %88 = vmatpush1.msra.mxu0 %v49
    %89 = vmatprep.subr.mxu0 0.0
    %90 = vmatpush1.msra.mxu0 %v50
    %91 = vmatprep.subr.mxu0 0.0
    %92 = vmatpush1.msra.mxu0 %v51
    %93 = vmatprep.subr.mxu0 0.0
    %94 = vmatpush1.msra.mxu0 %v52
    %95 = vmatprep.subr.mxu0 0.0
    %96 = vmatpush1.msra.mxu0 %v53
    %97 = vmatprep.subr.mxu0 0.0
    %98 = vmatpush1.msra.mxu0 %v54
    %99 = vmatprep.subr.mxu0 0.0
    %100 = vmatpush1.msra.mxu0 %v55
    %101 = vmatprep.subr.mxu0 0.0
    %102 = vmatpush1.msra.mxu0 %v56
    %103 = vmatprep.subr.mxu0 0.0
    %104 = vmatpush1.msra.mxu0 %v57
    %105 = vmatprep.subr.mxu0 0.0
    %106 = vmatpush1.msra.mxu0 %v58
    %107 = vmatprep.subr.mxu0 0.0
    %108 = vmatpush1.msra.mxu0 %v59
    %109 = vmatprep.subr.mxu0 0.0
    %110 = vmatpush1.msra.mxu0 %v60
    %111 = vmatprep.subr.mxu0 0.0
    %112 = vmatpush1.msra.mxu0 %v61
    %113 = vmatprep.subr.mxu0 0.0
    %114 = vmatpush1.msra.mxu0 %v62
    %115 = vmatprep.subr.mxu0 0.0
    %116 = vmatpush1.msra.mxu0 %v63
    %117 = vmatprep.subr.mxu0 0.0
    %118 = vmatpush1.msra.mxu0 %v64
    %119 = vmatprep.subr.mxu0 0.0
    %120 = vmatpush1.msra.mxu0 %v65
    %121 = vmatprep.subr.mxu0 0.0
    %122 = vmatpush1.msra.mxu0 %v66
    %123 = vmatprep.subr.mxu0 0.0
    %124 = vmatpush1.msra.mxu0 %v67
    %125 = vmatprep.subr.mxu0 0.0
    %126 = vmatpush1.msra.mxu0 %v68
    %127 = vmatprep.subr.mxu0 0.0
    %128 = vmatpush1.msra.mxu0 %v69
    %129 = vmatprep.subr.mxu0 0.0
    %130 = vmatpush1.msra.mxu0 %v70
    %131 = vmatprep.subr.mxu0 0.0
    %132 = vmatpush1.msra.mxu0 %v71
    %133 = vmatprep.subr.mxu0 0.0
    %134 = vmatpush1.msra.mxu0 %v72
    %135 = vmatprep.subr.mxu0 0.0
    %136 = vmatpush1.msra.mxu0 %v73
    %137 = vmatprep.subr.mxu0 0.0
    %138 = vmatpush1.msra.mxu0 %v74
    %139 = vmatprep.mubr.f32.mxu0 %v36
    %140 = vmatmul.mubr.f32.gmra.mrb[0].mxu0 %v35
    %v141 = vpop.f32.mrb[0].mxu0
    %v142 = vadd.f32 0.0, %v141
    %v143 = vpop.f32.mrb[0].mxu0
    %144 = vmatprep.mubr.f32.mxu0 %v38
    %145 = vmatmul.mubr.f32.gmra.mrb[0].mxu0 %v37
    %v146 = vpop.f32.mrb[0].mxu0
    %v147 = vadd.f32 0.0, %v146
    %v148 = vpop.f32.mrb[0].mxu0
    %149 = vmatprep.mubr.f32.mxu0 %v40
    %150 = vmatmul.mubr.f32.gmra.mrb[0].mxu0 %v39
    %v151 = vpop.f32.mrb[0].mxu0
    %v152 = vadd.f32 0.0, %v151
    %v153 = vpop.f32.mrb[0].mxu0
    %154 = vmatprep.mubr.f32.mxu0 %v42
    %155 = vmatmul.mubr.f32.gmra.mrb[0].mxu0 %v41
    %v156 = vpop.f32.mrb[0].mxu0
    %v157 = vadd.f32 0.0, %v156
    %v158 = vpop.f32.mrb[0].mxu0
    %159 = vdwg.mxu0
    %v160 = vld [vmem:[%s3] sm:$0xff]
    %v161 = vld [vmem:[%s3 + $0x8] sm:$0xff]
    %v162 = vld [vmem:[%s3 + $0x10] sm:$0xff]
    %v163 = vld [vmem:[%s3 + $0x18] sm:$0xff]
    %vm164 = vcmask 261120
    %v166 = vsel %vm164, %v160, 0
    %v169 = vsel %vm164, %v161, 0
    %v172 = vsel %vm164, %v162, 0
    %v175 = vsel %vm164, %v163, 0
    %177 = vmatprep.subr.mxu0 0.0
    %178 = vmatpush1.msra.mxu0 %v142
    %179 = vmatprep.subr.mxu0 0.0
    %180 = vmatpush1.msra.mxu0 %v147
    %181 = vmatprep.subr.mxu0 0.0
    %182 = vmatpush1.msra.mxu0 %v152
    %183 = vmatprep.subr.mxu0 0.0
    %184 = vmatpush1.msra.mxu0 %v157
    %185 = vmatprep.subr.mxu0 0.0
    %186 = vmatpush1.msra.mxu0 0.0
    %187 = vmatprep.subr.mxu0 0.0
    %188 = vmatpush1.msra.mxu0 0.0
    %189 = vmatprep.subr.mxu0 0.0
    %190 = vmatpush1.msra.mxu0 0.0
    %191 = vmatprep.subr.mxu0 0.0
    %192 = vmatpush1.msra.mxu0 0.0
    %193 = vmatprep.subr.mxu0 0.0
    %194 = vmatpush1.msra.mxu0 0.0
    %195 = vmatprep.subr.mxu0 0.0
    %196 = vmatpush1.msra.mxu0 0.0
    %197 = vmatprep.subr.mxu0 0.0
    %198 = vmatpush1.msra.mxu0 0.0
    %199 = vmatprep.subr.mxu0 0.0
    %200 = vmatpush1.msra.mxu0 0.0
    %201 = vmatprep.subr.mxu0 0.0
    %202 = vmatpush1.msra.mxu0 0.0
    %203 = vmatprep.subr.mxu0 0.0
    %204 = vmatpush1.msra.mxu0 0.0
    %205 = vmatprep.subr.mxu0 0.0
    %206 = vmatpush1.msra.mxu0 0.0
    %207 = vmatprep.subr.mxu0 0.0
    %208 = vmatpush1.msra.mxu0 0.0
    %209 = vmatprep.subr.mxu0 0.0
    %210 = vmatpush1.msra.mxu0 0.0
    %211 = vmatprep.subr.mxu0 0.0
    %212 = vmatpush1.msra.mxu0 0.0
    %213 = vmatprep.subr.mxu0 0.0
    %214 = vmatpush1.msra.mxu0 0.0
    %215 = vmatprep.subr.mxu0 0.0
    %216 = vmatpush1.msra.mxu0 0.0
    %217 = vmatprep.subr.mxu0 0.0
    %218 = vmatpush1.msra.mxu0 0.0
    %219 = vmatprep.subr.mxu0 0.0
    %220 = vmatpush1.msra.mxu0 0.0
    %221 = vmatprep.subr.mxu0 0.0
    %222 = vmatpush1.msra.mxu0 0.0
    %223 = vmatprep.subr.mxu0 0.0
    %224 = vmatpush1.msra.mxu0 0.0
    %225 = vmatprep.subr.mxu0 0.0
    %226 = vmatpush1.msra.mxu0 0.0
    %227 = vmatprep.subr.mxu0 0.0
    %228 = vmatpush1.msra.mxu0 0.0
    %229 = vmatprep.subr.mxu0 0.0
    %230 = vmatpush1.msra.mxu0 0.0
    %231 = vmatprep.subr.mxu0 0.0
    %232 = vmatpush1.msra.mxu0 0.0
    %233 = vmatprep.subr.mxu0 0.0
    %234 = vmatpush1.msra.mxu0 0.0
    %235 = vmatprep.subr.mxu0 0.0
    %236 = vmatpush1.msra.mxu0 0.0
    %237 = vmatprep.subr.mxu0 0.0
    %238 = vmatpush1.msra.mxu0 0.0
    %239 = vmatprep.subr.mxu0 0.0
    %240 = vmatpush1.msra.mxu0 0.0
    %241 = vmatprep.mubr.f32.mxu0 0.0
    %242 = vmatmul.mubr.f32.gmra.mrb[0].mxu0 %v166
    %v243 = vpop.f32.mrb[0].mxu0
    %v244 = vadd.f32 0.0, %v243
    %v245 = vpop.f32.mrb[0].mxu0
    %246 = vmatprep.mubr.f32.mxu0 0.0
    %247 = vmatmul.mubr.f32.gmra.mrb[0].mxu0 %v169
    %v248 = vpop.f32.mrb[0].mxu0
    %v249 = vadd.f32 0.0, %v248
    %v250 = vpop.f32.mrb[0].mxu0
    %251 = vmatprep.mubr.f32.mxu0 0.0
    %252 = vmatmul.mubr.f32.gmra.mrb[0].mxu0 %v172
    %v253 = vpop.f32.mrb[0].mxu0
    %v254 = vadd.f32 0.0, %v253
    %v255 = vpop.f32.mrb[0].mxu0
    %256 = vmatprep.mubr.f32.mxu0 0.0
    %257 = vmatmul.mubr.f32.gmra.mrb[0].mxu0 %v175
    %v258 = vpop.f32.mrb[0].mxu0
    %v259 = vadd.f32 0.0, %v258
    %v260 = vpop.f32.mrb[0].mxu0
    %261 = vdwg.mxu0
    %v262 = vld [vmem:[%s2] sm:$0xff]
    %v263 = vld [vmem:[%s2 + $0x8] sm:$0xff]
    %v264 = vld [vmem:[%s2 + $0x10] sm:$0xff]
    %v265 = vld [vmem:[%s2 + $0x18] sm:$0xff]
    %s266 = scalar_lea.vmem %s3, 32
    %v267 = vld [vmem:[%s266] sm:$0xff]
    %v268 = vld [vmem:[%s266 + $0x8] sm:$0xff]
    %v269 = vld [vmem:[%s266 + $0x10] sm:$0xff]
    %v270 = vld [vmem:[%s266 + $0x18] sm:$0xff]
    %v272 = vsel %vm164, %v267, 0
    %v275 = vsel %vm164, %v268, 0
    %v278 = vsel %vm164, %v269, 0
    %v281 = vsel %vm164, %v270, 0
    %283 = vmatprep.subr.mxu0 0.0
    %284 = vmatpush1.msra.mxu0 %v142
    %285 = vmatprep.subr.mxu0 0.0
    %286 = vmatpush1.msra.mxu0 %v147
    %287 = vmatprep.subr.mxu0 0.0
    %288 = vmatpush1.msra.mxu0 %v152
    %289 = vmatprep.subr.mxu0 0.0
    %290 = vmatpush1.msra.mxu0 %v157
    %291 = vmatprep.subr.mxu0 0.0
    %292 = vmatpush1.msra.mxu0 0.0
    %293 = vmatprep.subr.mxu0 0.0
    %294 = vmatpush1.msra.mxu0 0.0
    %295 = vmatprep.subr.mxu0 0.0
    %296 = vmatpush1.msra.mxu0 0.0
    %297 = vmatprep.subr.mxu0 0.0
    %298 = vmatpush1.msra.mxu0 0.0
    %299 = vmatprep.subr.mxu0 0.0
    %300 = vmatpush1.msra.mxu0 0.0
    %301 = vmatprep.subr.mxu0 0.0
    %302 = vmatpush1.msra.mxu0 0.0
    %303 = vmatprep.subr.mxu0 0.0
    %304 = vmatpush1.msra.mxu0 0.0
    %305 = vmatprep.subr.mxu0 0.0
    %306 = vmatpush1.msra.mxu0 0.0
    %307 = vmatprep.subr.mxu0 0.0
    %308 = vmatpush1.msra.mxu0 0.0
    %309 = vmatprep.subr.mxu0 0.0
    %310 = vmatpush1.msra.mxu0 0.0
    %311 = vmatprep.subr.mxu0 0.0
    %312 = vmatpush1.msra.mxu0 0.0
    %313 = vmatprep.subr.mxu0 0.0
    %314 = vmatpush1.msra.mxu0 0.0
    %315 = vmatprep.subr.mxu0 0.0
    %316 = vmatpush1.msra.mxu0 0.0
    %317 = vmatprep.subr.mxu0 0.0
    %318 = vmatpush1.msra.mxu0 0.0
    %319 = vmatprep.subr.mxu0 0.0
    %320 = vmatpush1.msra.mxu0 0.0
    %321 = vmatprep.subr.mxu0 0.0
    %322 = vmatpush1.msra.mxu0 0.0
    %323 = vmatprep.subr.mxu0 0.0
    %324 = vmatpush1.msra.mxu0 0.0
    %325 = vmatprep.subr.mxu0 0.0
    %326 = vmatpush1.msra.mxu0 0.0
    %327 = vmatprep.subr.mxu0 0.0
    %328 = vmatpush1.msra.mxu0 0.0
    %329 = vmatprep.subr.mxu0 0.0
    %330 = vmatpush1.msra.mxu0 0.0
    %331 = vmatprep.subr.mxu0 0.0
    %332 = vmatpush1.msra.mxu0 0.0
    %333 = vmatprep.subr.mxu0 0.0
    %334 = vmatpush1.msra.mxu0 0.0
    %335 = vmatprep.subr.mxu0 0.0
    %336 = vmatpush1.msra.mxu0 0.0
    %337 = vmatprep.subr.mxu0 0.0
    %338 = vmatpush1.msra.mxu0 0.0
    %339 = vmatprep.subr.mxu0 0.0
    %340 = vmatpush1.msra.mxu0 0.0
    %341 = vmatprep.subr.mxu0 0.0
    %342 = vmatpush1.msra.mxu0 0.0
    %343 = vmatprep.subr.mxu0 0.0
    %344 = vmatpush1.msra.mxu0 0.0
    %345 = vmatprep.subr.mxu0 0.0
    %346 = vmatpush1.msra.mxu0 0.0
    %347 = vmatprep.mubr.f32.mxu0 0.0
    %348 = vmatmul.mubr.f32.gmra.mrb[0].mxu0 %v272
    %v349 = vpop.f32.mrb[0].mxu0
    %v350 = vadd.f32 0.0, %v349
    %v351 = vpop.f32.mrb[0].mxu0
    %352 = vmatprep.mubr.f32.mxu0 0.0
    %353 = vmatmul.mubr.f32.gmra.mrb[0].mxu0 %v275
    %v354 = vpop.f32.mrb[0].mxu0
    %v355 = vadd.f32 0.0, %v354
    %v356 = vpop.f32.mrb[0].mxu0
    %357 = vmatprep.mubr.f32.mxu0 0.0
    %358 = vmatmul.mubr.f32.gmra.mrb[0].mxu0 %v278
    %v359 = vpop.f32.mrb[0].mxu0
    %v360 = vadd.f32 0.0, %v359
    %v361 = vpop.f32.mrb[0].mxu0
    %362 = vmatprep.mubr.f32.mxu0 0.0
    %363 = vmatmul.mubr.f32.gmra.mrb[0].mxu0 %v281
    %v364 = vpop.f32.mrb[0].mxu0
    %v365 = vadd.f32 0.0, %v364
    %v366 = vpop.f32.mrb[0].mxu0
    %367 = vdwg.mxu0
    %s368 = scalar_lea.vmem %s2, 32
    %v369 = vld [vmem:[%s368] sm:$0xff]
    %v370 = vld [vmem:[%s368 + $0x8] sm:$0xff]
    %v371 = vld [vmem:[%s368 + $0x10] sm:$0xff]
    %v372 = vld [vmem:[%s368 + $0x18] sm:$0xff]
    %v374 = vsel %vm164, %v350, 0
    %v377 = vsel %vm164, %v355, 0
    %v380 = vsel %vm164, %v360, 0
    %v383 = vsel %vm164, %v365, 0
    %385 = vmatprep.subr.mxu0 0.0
    %386 = vmatpush1.msra.mxu0 %v369
    %387 = vmatprep.subr.mxu0 0.0
    %388 = vmatpush1.msra.mxu0 %v370
    %389 = vmatprep.subr.mxu0 0.0
    %390 = vmatpush1.msra.mxu0 %v371
    %391 = vmatprep.subr.mxu0 0.0
    %392 = vmatpush1.msra.mxu0 %v372
    %393 = vmatprep.subr.mxu0 0.0
    %394 = vmatpush1.msra.mxu0 0.0
    %395 = vmatprep.subr.mxu0 0.0
    %396 = vmatpush1.msra.mxu0 0.0
    %397 = vmatprep.subr.mxu0 0.0
    %398 = vmatpush1.msra.mxu0 0.0
    %399 = vmatprep.subr.mxu0 0.0
    %400 = vmatpush1.msra.mxu0 0.0
    %401 = vmatprep.subr.mxu0 0.0
    %402 = vmatpush1.msra.mxu0 0.0
    %403 = vmatprep.subr.mxu0 0.0
    %404 = vmatpush1.msra.mxu0 0.0
    %405 = vmatprep.subr.mxu0 0.0
    %406 = vmatpush1.msra.mxu0 0.0
    %407 = vmatprep.subr.mxu0 0.0
    %408 = vmatpush1.msra.mxu0 0.0
    %409 = vmatprep.subr.mxu0 0.0
    %410 = vmatpush1.msra.mxu0 0.0
    %411 = vmatprep.subr.mxu0 0.0
    %412 = vmatpush1.msra.mxu0 0.0
    %413 = vmatprep.subr.mxu0 0.0
    %414 = vmatpush1.msra.mxu0 0.0
    %415 = vmatprep.subr.mxu0 0.0
    %416 = vmatpush1.msra.mxu0 0.0
    %417 = vmatprep.subr.mxu0 0.0
    %418 = vmatpush1.msra.mxu0 0.0
    %419 = vmatprep.subr.mxu0 0.0
    %420 = vmatpush1.msra.mxu0 0.0
    %421 = vmatprep.subr.mxu0 0.0
    %422 = vmatpush1.msra.mxu0 0.0
    %423 = vmatprep.subr.mxu0 0.0
    %424 = vmatpush1.msra.mxu0 0.0
    %425 = vmatprep.subr.mxu0 0.0
    %426 = vmatpush1.msra.mxu0 0.0
    %427 = vmatprep.subr.mxu0 0.0
    %428 = vmatpush1.msra.mxu0 0.0
    %429 = vmatprep.subr.mxu0 0.0
    %430 = vmatpush1.msra.mxu0 0.0
    %431 = vmatprep.subr.mxu0 0.0
    %432 = vmatpush1.msra.mxu0 0.0
    %433 = vmatprep.subr.mxu0 0.0
    %434 = vmatpush1.msra.mxu0 0.0
    %435 = vmatprep.subr.mxu0 0.0
    %436 = vmatpush1.msra.mxu0 0.0
    %437 = vmatprep.subr.mxu0 0.0
    %438 = vmatpush1.msra.mxu0 0.0
    %439 = vmatprep.subr.mxu0 0.0
    %440 = vmatpush1.msra.mxu0 0.0
    %441 = vmatprep.subr.mxu0 0.0
    %442 = vmatpush1.msra.mxu0 0.0
    %443 = vmatprep.subr.mxu0 0.0
    %444 = vmatpush1.msra.mxu0 0.0
    %445 = vmatprep.subr.mxu0 0.0
    %446 = vmatpush1.msra.mxu0 0.0
    %447 = vmatprep.subr.mxu0 0.0
    %448 = vmatpush1.msra.mxu0 0.0
    %449 = vmatprep.mubr.f32.mxu0 0.0
    %450 = vmatmul.mubr.f32.gmra.mrb[0].mxu0 %v374
    %v451 = vpop.f32.mrb[0].mxu0
    %v452 = vadd.f32 0.0, %v451
    %v453 = vpop.f32.mrb[0].mxu0
    %454 = vmatprep.mubr.f32.mxu0 0.0
    %455 = vmatmul.mubr.f32.gmra.mrb[0].mxu0 %v377
    %v456 = vpop.f32.mrb[0].mxu0
    %v457 = vadd.f32 0.0, %v456
    %v458 = vpop.f32.mrb[0].mxu0
    %459 = vmatprep.mubr.f32.mxu0 0.0
    %460 = vmatmul.mubr.f32.gmra.mrb[0].mxu0 %v380
    %v461 = vpop.f32.mrb[0].mxu0
    %v462 = vadd.f32 0.0, %v461
    %v463 = vpop.f32.mrb[0].mxu0
    %464 = vmatprep.mubr.f32.mxu0 0.0
    %465 = vmatmul.mubr.f32.gmra.mrb[0].mxu0 %v383
    %v466 = vpop.f32.mrb[0].mxu0
    %v467 = vadd.f32 0.0, %v466
    %v468 = vpop.f32.mrb[0].mxu0
    %469 = vdwg.mxu0
    %v471 = vsel %vm164, %v244, 0
    %v474 = vsel %vm164, %v249, 0
    %v477 = vsel %vm164, %v254, 0
    %v480 = vsel %vm164, %v259, 0
    %482 = vmatprep.subr.mxu0 0.0
    %483 = vmatpush1.msra.mxu0 %v262
    %484 = vmatprep.subr.mxu0 0.0
    %485 = vmatpush1.msra.mxu0 %v263
    %486 = vmatprep.subr.mxu0 0.0
    %487 = vmatpush1.msra.mxu0 %v264
    %488 = vmatprep.subr.mxu0 0.0
    %489 = vmatpush1.msra.mxu0 %v265
    %490 = vmatprep.subr.mxu0 0.0
    %491 = vmatpush1.msra.mxu0 0.0
    %492 = vmatprep.subr.mxu0 0.0
    %493 = vmatpush1.msra.mxu0 0.0
    %494 = vmatprep.subr.mxu0 0.0
    %495 = vmatpush1.msra.mxu0 0.0
    %496 = vmatprep.subr.mxu0 0.0
    %497 = vmatpush1.msra.mxu0 0.0
    %498 = vmatprep.subr.mxu0 0.0
    %499 = vmatpush1.msra.mxu0 0.0
    %500 = vmatprep.subr.mxu0 0.0
    %501 = vmatpush1.msra.mxu0 0.0
    %502 = vmatprep.subr.mxu0 0.0
    %503 = vmatpush1.msra.mxu0 0.0
    %504 = vmatprep.subr.mxu0 0.0
    %505 = vmatpush1.msra.mxu0 0.0
    %506 = vmatprep.subr.mxu0 0.0
    %507 = vmatpush1.msra.mxu0 0.0
    %508 = vmatprep.subr.mxu0 0.0
    %509 = vmatpush1.msra.mxu0 0.0
    %510 = vmatprep.subr.mxu0 0.0
    %511 = vmatpush1.msra.mxu0 0.0
    %512 = vmatprep.subr.mxu0 0.0
    %513 = vmatpush1.msra.mxu0 0.0
    %514 = vmatprep.subr.mxu0 0.0
    %515 = vmatpush1.msra.mxu0 0.0
    %516 = vmatprep.subr.mxu0 0.0
    %517 = vmatpush1.msra.mxu0 0.0
    %518 = vmatprep.subr.mxu0 0.0
    %519 = vmatpush1.msra.mxu0 0.0
    %520 = vmatprep.subr.mxu0 0.0
    %521 = vmatpush1.msra.mxu0 0.0
    %522 = vmatprep.subr.mxu0 0.0
    %523 = vmatpush1.msra.mxu0 0.0
    %524 = vmatprep.subr.mxu0 0.0
    %525 = vmatpush1.msra.mxu0 0.0
    %526 = vmatprep.subr.mxu0 0.0
    %527 = vmatpush1.msra.mxu0 0.0
    %528 = vmatprep.subr.mxu0 0.0
    %529 = vmatpush1.msra.mxu0 0.0
    %530 = vmatprep.subr.mxu0 0.0
    %531 = vmatpush1.msra.mxu0 0.0
    %532 = vmatprep.subr.mxu0 0.0
    %533 = vmatpush1.msra.mxu0 0.0
    %534 = vmatprep.subr.mxu0 0.0
    %535 = vmatpush1.msra.mxu0 0.0
    %536 = vmatprep.subr.mxu0 0.0
    %537 = vmatpush1.msra.mxu0 0.0
    %538 = vmatprep.subr.mxu0 0.0
    %539 = vmatpush1.msra.mxu0 0.0
    %540 = vmatprep.subr.mxu0 0.0
    %541 = vmatpush1.msra.mxu0 0.0
    %542 = vmatprep.subr.mxu0 0.0
    %543 = vmatpush1.msra.mxu0 0.0
    %544 = vmatprep.subr.mxu0 0.0
    %545 = vmatpush1.msra.mxu0 0.0
    %546 = vmatprep.mubr.f32.mxu0 0.0
    %547 = vmatmul.mubr.f32.gmra.mrb[0].mxu0 %v471
    %v548 = vpop.f32.mrb[0].mxu0
    %v549 = vadd.f32 %v452, %v548
    %v550 = vpop.f32.mrb[0].mxu0
    %551 = vmatprep.mubr.f32.mxu0 0.0
    %552 = vmatmul.mubr.f32.gmra.mrb[0].mxu0 %v474
    %v553 = vpop.f32.mrb[0].mxu0
    %v554 = vadd.f32 %v457, %v553
    %v555 = vpop.f32.mrb[0].mxu0
    %556 = vmatprep.mubr.f32.mxu0 0.0
    %557 = vmatmul.mubr.f32.gmra.mrb[0].mxu0 %v477
    %v558 = vpop.f32.mrb[0].mxu0
    %v559 = vadd.f32 %v462, %v558
    %v560 = vpop.f32.mrb[0].mxu0
    %561 = vmatprep.mubr.f32.mxu0 0.0
    %562 = vmatmul.mubr.f32.gmra.mrb[0].mxu0 %v480
    %v563 = vpop.f32.mrb[0].mxu0
    %v564 = vadd.f32 %v467, %v563
    %v565 = vpop.f32.mrb[0].mxu0
    %566 = vdwg.mxu0
    %s567 = scalar_lea.vmem %s3, 64
    %v568 = vld [vmem:[%s567] sm:$0xff]
    %v569 = vld [vmem:[%s567 + $0x8] sm:$0xff]
    %v570 = vld [vmem:[%s567 + $0x10] sm:$0xff]
    %v571 = vld [vmem:[%s567 + $0x18] sm:$0xff]
    %v573 = vsel %vm164, %v568, 0
    %v576 = vsel %vm164, %v569, 0
    %v579 = vsel %vm164, %v570, 0
    %v582 = vsel %vm164, %v571, 0
    %584 = vmatprep.subr.mxu0 0.0
    %585 = vmatpush1.msra.mxu0 %v142
    %586 = vmatprep.subr.mxu0 0.0
    %587 = vmatpush1.msra.mxu0 %v147
    %588 = vmatprep.subr.mxu0 0.0
    %589 = vmatpush1.msra.mxu0 %v152
    %590 = vmatprep.subr.mxu0 0.0
    %591 = vmatpush1.msra.mxu0 %v157
    %592 = vmatprep.subr.mxu0 0.0
    %593 = vmatpush1.msra.mxu0 0.0
    %594 = vmatprep.subr.mxu0 0.0
    %595 = vmatpush1.msra.mxu0 0.0
    %596 = vmatprep.subr.mxu0 0.0
    %597 = vmatpush1.msra.mxu0 0.0
    %598 = vmatprep.subr.mxu0 0.0
    %599 = vmatpush1.msra.mxu0 0.0
    %600 = vmatprep.subr.mxu0 0.0
    %601 = vmatpush1.msra.mxu0 0.0
    %602 = vmatprep.subr.mxu0 0.0
    %603 = vmatpush1.msra.mxu0 0.0
    %604 = vmatprep.subr.mxu0 0.0
    %605 = vmatpush1.msra.mxu0 0.0
    %606 = vmatprep.subr.mxu0 0.0
    %607 = vmatpush1.msra.mxu0 0.0
    %608 = vmatprep.subr.mxu0 0.0
    %609 = vmatpush1.msra.mxu0 0.0
    %610 = vmatprep.subr.mxu0 0.0
    %611 = vmatpush1.msra.mxu0 0.0
    %612 = vmatprep.subr.mxu0 0.0
    %613 = vmatpush1.msra.mxu0 0.0
    %614 = vmatprep.subr.mxu0 0.0
    %615 = vmatpush1.msra.mxu0 0.0
    %616 = vmatprep.subr.mxu0 0.0
    %617 = vmatpush1.msra.mxu0 0.0
    %618 = vmatprep.subr.mxu0 0.0
    %619 = vmatpush1.msra.mxu0 0.0
    %620 = vmatprep.subr.mxu0 0.0
    %621 = vmatpush1.msra.mxu0 0.0
    %622 = vmatprep.subr.mxu0 0.0
    %623 = vmatpush1.msra.mxu0 0.0
    %624 = vmatprep.subr.mxu0 0.0
    %625 = vmatpush1.msra.mxu0 0.0
    %626 = vmatprep.subr.mxu0 0.0
    %627 = vmatpush1.msra.mxu0 0.0
    %628 = vmatprep.subr.mxu0 0.0
    %629 = vmatpush1.msra.mxu0 0.0
    %630 = vmatprep.subr.mxu0 0.0
    %631 = vmatpush1.msra.mxu0 0.0
    %632 = vmatprep.subr.mxu0 0.0
    %633 = vmatpush1.msra.mxu0 0.0
    %634 = vmatprep.subr.mxu0 0.0
    %635 = vmatpush1.msra.mxu0 0.0
    %636 = vmatprep.subr.mxu0 0.0
    %637 = vmatpush1.msra.mxu0 0.0
    %638 = vmatprep.subr.mxu0 0.0
    %639 = vmatpush1.msra.mxu0 0.0
    %640 = vmatprep.subr.mxu0 0.0
    %641 = vmatpush1.msra.mxu0 0.0
    %642 = vmatprep.subr.mxu0 0.0
    %643 = vmatpush1.msra.mxu0 0.0
    %644 = vmatprep.subr.mxu0 0.0
    %645 = vmatpush1.msra.mxu0 0.0
    %646 = vmatprep.subr.mxu0 0.0
    %647 = vmatpush1.msra.mxu0 0.0
    %648 = vmatprep.mubr.f32.mxu0 0.0
    %649 = vmatmul.mubr.f32.gmra.mrb[0].mxu0 %v573
    %v650 = vpop.f32.mrb[0].mxu0
    %v651 = vadd.f32 0.0, %v650
    %v652 = vpop.f32.mrb[0].mxu0
    %653 = vmatprep.mubr.f32.mxu0 0.0
    %654 = vmatmul.mubr.f32.gmra.mrb[0].mxu0 %v576
    %v655 = vpop.f32.mrb[0].mxu0
    %v656 = vadd.f32 0.0, %v655
    %v657 = vpop.f32.mrb[0].mxu0
    %658 = vmatprep.mubr.f32.mxu0 0.0
    %659 = vmatmul.mubr.f32.gmra.mrb[0].mxu0 %v579
    %v660 = vpop.f32.mrb[0].mxu0
    %v661 = vadd.f32 0.0, %v660
    %v662 = vpop.f32.mrb[0].mxu0
    %663 = vmatprep.mubr.f32.mxu0 0.0
    %664 = vmatmul.mubr.f32.gmra.mrb[0].mxu0 %v582
    %v665 = vpop.f32.mrb[0].mxu0
    %v666 = vadd.f32 0.0, %v665
    %v667 = vpop.f32.mrb[0].mxu0
    %668 = vdwg.mxu0
    %s669 = scalar_lea.vmem %s2, 64
    %v670 = vld [vmem:[%s669] sm:$0xff]
    %v671 = vld [vmem:[%s669 + $0x8] sm:$0xff]
    %v672 = vld [vmem:[%s669 + $0x10] sm:$0xff]
    %v673 = vld [vmem:[%s669 + $0x18] sm:$0xff]
    %v675 = vsel %vm164, %v651, 0
    %v678 = vsel %vm164, %v656, 0
    %v681 = vsel %vm164, %v661, 0
    %v684 = vsel %vm164, %v666, 0
    %686 = vmatprep.subr.mxu0 0.0
    %687 = vmatpush1.msra.mxu0 %v670
    %688 = vmatprep.subr.mxu0 0.0
    %689 = vmatpush1.msra.mxu0 %v671
    %690 = vmatprep.subr.mxu0 0.0
    %691 = vmatpush1.msra.mxu0 %v672
    %692 = vmatprep.subr.mxu0 0.0
    %693 = vmatpush1.msra.mxu0 %v673
    %694 = vmatprep.subr.mxu0 0.0
    %695 = vmatpush1.msra.mxu0 0.0
    %696 = vmatprep.subr.mxu0 0.0
    %697 = vmatpush1.msra.mxu0 0.0
    %698 = vmatprep.subr.mxu0 0.0
    %699 = vmatpush1.msra.mxu0 0.0
    %700 = vmatprep.subr.mxu0 0.0
    %701 = vmatpush1.msra.mxu0 0.0
    %702 = vmatprep.subr.mxu0 0.0
    %703 = vmatpush1.msra.mxu0 0.0
    %704 = vmatprep.subr.mxu0 0.0
    %705 = vmatpush1.msra.mxu0 0.0
    %706 = vmatprep.subr.mxu0 0.0
    %707 = vmatpush1.msra.mxu0 0.0
    %708 = vmatprep.subr.mxu0 0.0
    %709 = vmatpush1.msra.mxu0 0.0
    %710 = vmatprep.subr.mxu0 0.0
    %711 = vmatpush1.msra.mxu0 0.0
    %712 = vmatprep.subr.mxu0 0.0
    %713 = vmatpush1.msra.mxu0 0.0
    %714 = vmatprep.subr.mxu0 0.0
    %715 = vmatpush1.msra.mxu0 0.0
    %716 = vmatprep.subr.mxu0 0.0
    %717 = vmatpush1.msra.mxu0 0.0
    %718 = vmatprep.subr.mxu0 0.0
    %719 = vmatpush1.msra.mxu0 0.0
    %720 = vmatprep.subr.mxu0 0.0
    %721 = vmatpush1.msra.mxu0 0.0
    %722 = vmatprep.subr.mxu0 0.0
    %723 = vmatpush1.msra.mxu0 0.0
    %724 = vmatprep.subr.mxu0 0.0
    %725 = vmatpush1.msra.mxu0 0.0
    %726 = vmatprep.subr.mxu0 0.0
    %727 = vmatpush1.msra.mxu0 0.0
    %728 = vmatprep.subr.mxu0 0.0
    %729 = vmatpush1.msra.mxu0 0.0
    %730 = vmatprep.subr.mxu0 0.0
    %731 = vmatpush1.msra.mxu0 0.0
    %732 = vmatprep.subr.mxu0 0.0
    %733 = vmatpush1.msra.mxu0 0.0
    %734 = vmatprep.subr.mxu0 0.0
    %735 = vmatpush1.msra.mxu0 0.0
    %736 = vmatprep.subr.mxu0 0.0
    %737 = vmatpush1.msra.mxu0 0.0
    %738 = vmatprep.subr.mxu0 0.0
    %739 = vmatpush1.msra.mxu0 0.0
    %740 = vmatprep.subr.mxu0 0.0
    %741 = vmatpush1.msra.mxu0 0.0
    %742 = vmatprep.subr.mxu0 0.0
    %743 = vmatpush1.msra.mxu0 0.0
    %744 = vmatprep.subr.mxu0 0.0
    %745 = vmatpush1.msra.mxu0 0.0
    %746 = vmatprep.subr.mxu0 0.0
    %747 = vmatpush1.msra.mxu0 0.0
    %748 = vmatprep.subr.mxu0 0.0
    %749 = vmatpush1.msra.mxu0 0.0
    %750 = vmatprep.mubr.f32.mxu0 0.0
    %751 = vmatmul.mubr.f32.gmra.mrb[0].mxu0 %v675
    %v752 = vpop.f32.mrb[0].mxu0
    %v753 = vadd.f32 0.0, %v752
    %v754 = vpop.f32.mrb[0].mxu0
    %755 = vmatprep.mubr.f32.mxu0 0.0
    %756 = vmatmul.mubr.f32.gmra.mrb[0].mxu0 %v678
    %v757 = vpop.f32.mrb[0].mxu0
    %v758 = vadd.f32 0.0, %v757
    %v759 = vpop.f32.mrb[0].mxu0
    %760 = vmatprep.mubr.f32.mxu0 0.0
    %761 = vmatmul.mubr.f32.gmra.mrb[0].mxu0 %v681
    %v762 = vpop.f32.mrb[0].mxu0
    %v763 = vadd.f32 0.0, %v762
    %v764 = vpop.f32.mrb[0].mxu0
    %765 = vmatprep.mubr.f32.mxu0 0.0
    %766 = vmatmul.mubr.f32.gmra.mrb[0].mxu0 %v684
    %v767 = vpop.f32.mrb[0].mxu0
    %v768 = vadd.f32 0.0, %v767
    %v769 = vpop.f32.mrb[0].mxu0
    %770 = vdwg.mxu0
    %v771 = vadd.f32 %v549, %v753
    %v772 = vadd.f32 %v554, %v758
    %v773 = vadd.f32 %v559, %v763
    %v774 = vadd.f32 %v564, %v768
    %v775 = vxor.u32 %v771, 2147483648
    %v776 = vxor.u32 %v772, 2147483648
    %v777 = vxor.u32 %v773, 2147483648
    %v778 = vxor.u32 %v774, 2147483648
    %v779 = vmul.f32 %v775, 1.442695
    %v780 = vpow.pop %v779
    %v781 = vmul.f32 %v776, 1.442695
    %v782 = vpow.pop %v781
    %v783 = vmul.f32 %v777, 1.442695
    %v784 = vpow.pop %v783
    %v785 = vmul.f32 %v778, 1.442695
    %v786 = vpow.pop %v785
    %v787 = vadd.f32 %v780, 1.0
    %v788 = vadd.f32 %v782, 1.0
    %v789 = vadd.f32 %v784, 1.0
    %v790 = vadd.f32 %v786, 1.0
    %v791 = vrcp.pop %v787
    %v792 = vmul.f32 1.0, %v791
    %v793 = vrcp.pop %v788
    %v794 = vmul.f32 1.0, %v793
    %v795 = vrcp.pop %v789
    %v796 = vmul.f32 1.0, %v795
    %v797 = vrcp.pop %v790
    %v798 = vmul.f32 1.0, %v797
    %v799 = vld [vmem:[%s4] sm:$0xff]
    %v800 = vld [vmem:[%s4 + $0x8] sm:$0xff]
    %v801 = vld [vmem:[%s4 + $0x10] sm:$0xff]
    %v802 = vld [vmem:[%s4 + $0x18] sm:$0xff]
    %v803 = vld [vmem:[%s4 + $0x20] sm:$0xff]
    %v804 = vld [vmem:[%s4 + $0x28] sm:$0xff]
    %v805 = vld [vmem:[%s4 + $0x30] sm:$0xff]
    %v806 = vld [vmem:[%s4 + $0x38] sm:$0xff]
    %v807 = vld [vmem:[%s4 + $0x40] sm:$0xff]
    %v808 = vld [vmem:[%s4 + $0x48] sm:$0xff]
    %v809 = vld [vmem:[%s4 + $0x50] sm:$0xff]
    %v810 = vld [vmem:[%s4 + $0x58] sm:$0xff]
    %v811 = vld [vmem:[%s4 + $0x60] sm:$0xff]
    %v812 = vld [vmem:[%s4 + $0x68] sm:$0xff]
    %v813 = vld [vmem:[%s4 + $0x70] sm:$0xff]
    %v814 = vld [vmem:[%s4 + $0x78] sm:$0xff]
    %v816 = vsel %vm164, %v792, 0
    %v819 = vsel %vm164, %v794, 0
    %v822 = vsel %vm164, %v796, 0
    %v825 = vsel %vm164, %v798, 0
    %827 = vmatprep.subr.mxu0 %v800
    %828 = vmatpush1.msra.mxu0 %v799
    %829 = vmatprep.subr.mxu0 %v804
    %830 = vmatpush1.msra.mxu0 %v803
    %831 = vmatprep.subr.mxu0 %v808
    %832 = vmatpush1.msra.mxu0 %v807
    %833 = vmatprep.subr.mxu0 %v812
    %834 = vmatpush1.msra.mxu0 %v811
    %835 = vmatprep.subr.mxu0 0.0
    %836 = vmatpush1.msra.mxu0 0.0
    %837 = vmatprep.subr.mxu0 0.0
    %838 = vmatpush1.msra.mxu0 0.0
    %839 = vmatprep.subr.mxu0 0.0
    %840 = vmatpush1.msra.mxu0 0.0
    %841 = vmatprep.subr.mxu0 0.0
    %842 = vmatpush1.msra.mxu0 0.0
    %843 = vmatprep.subr.mxu0 0.0
    %844 = vmatpush1.msra.mxu0 0.0
    %845 = vmatprep.subr.mxu0 0.0
    %846 = vmatpush1.msra.mxu0 0.0
    %847 = vmatprep.subr.mxu0 0.0
    %848 = vmatpush1.msra.mxu0 0.0
    %849 = vmatprep.subr.mxu0 0.0
    %850 = vmatpush1.msra.mxu0 0.0
    %851 = vmatprep.subr.mxu0 0.0
    %852 = vmatpush1.msra.mxu0 0.0
    %853 = vmatprep.subr.mxu0 0.0
    %854 = vmatpush1.msra.mxu0 0.0
    %855 = vmatprep.subr.mxu0 0.0
    %856 = vmatpush1.msra.mxu0 0.0
    %857 = vmatprep.subr.mxu0 0.0
    %858 = vmatpush1.msra.mxu0 0.0
    %859 = vmatprep.subr.mxu0 0.0
    %860 = vmatpush1.msra.mxu0 0.0
    %861 = vmatprep.subr.mxu0 0.0
    %862 = vmatpush1.msra.mxu0 0.0
    %863 = vmatprep.subr.mxu0 0.0
    %864 = vmatpush1.msra.mxu0 0.0
    %865 = vmatprep.subr.mxu0 0.0
    %866 = vmatpush1.msra.mxu0 0.0
    %867 = vmatprep.subr.mxu0 0.0
    %868 = vmatpush1.msra.mxu0 0.0
    %869 = vmatprep.subr.mxu0 0.0
    %870 = vmatpush1.msra.mxu0 0.0
    %871 = vmatprep.subr.mxu0 0.0
    %872 = vmatpush1.msra.mxu0 0.0
    %873 = vmatprep.subr.mxu0 0.0
    %874 = vmatpush1.msra.mxu0 0.0
    %875 = vmatprep.subr.mxu0 0.0
    %876 = vmatpush1.msra.mxu0 0.0
    %877 = vmatprep.subr.mxu0 0.0
    %878 = vmatpush1.msra.mxu0 0.0
    %879 = vmatprep.subr.mxu0 0.0
    %880 = vmatpush1.msra.mxu0 0.0
    %881 = vmatprep.subr.mxu0 0.0
    %882 = vmatpush1.msra.mxu0 0.0
    %883 = vmatprep.subr.mxu0 0.0
    %884 = vmatpush1.msra.mxu0 0.0
    %885 = vmatprep.subr.mxu0 0.0
    %886 = vmatpush1.msra.mxu0 0.0
    %887 = vmatprep.subr.mxu0 0.0
    %888 = vmatpush1.msra.mxu0 0.0
    %889 = vmatprep.subr.mxu0 0.0
    %890 = vmatpush1.msra.mxu0 0.0
    %891 = vmatprep.mubr.f32.mxu0 0.0
    %892 = vmatmul.mubr.f32.gmra.mrb[0].mxu0 %v816
    %v893 = vpop.f32.mrb[0].mxu0
    %v894 = vadd.f32 0.0, %v893
    %v895 = vpop.f32.mrb[0].mxu0
    %v896 = vadd.f32 0.0, %v895
    %897 = vmatprep.mubr.f32.mxu0 0.0
    %898 = vmatmul.mubr.f32.gmra.mrb[0].mxu0 %v819
    %v899 = vpop.f32.mrb[0].mxu0
    %v900 = vadd.f32 0.0, %v899
    %v901 = vpop.f32.mrb[0].mxu0
    %v902 = vadd.f32 0.0, %v901
    %903 = vmatprep.mubr.f32.mxu0 0.0
    %904 = vmatmul.mubr.f32.gmra.mrb[0].mxu0 %v822
    %v905 = vpop.f32.mrb[0].mxu0
    %v906 = vadd.f32 0.0, %v905
    %v907 = vpop.f32.mrb[0].mxu0
    %v908 = vadd.f32 0.0, %v907
    %909 = vmatprep.mubr.f32.mxu0 0.0
    %910 = vmatmul.mubr.f32.gmra.mrb[0].mxu0 %v825
    %v911 = vpop.f32.mrb[0].mxu0
    %v912 = vadd.f32 0.0, %v911
    %v913 = vpop.f32.mrb[0].mxu0
    %v914 = vadd.f32 0.0, %v913
    %915 = vdwg.mxu0
    %916 = vmatprep.subr.mxu0 %v802
    %917 = vmatpush1.msra.mxu0 %v801
    %918 = vmatprep.subr.mxu0 %v806
    %919 = vmatpush1.msra.mxu0 %v805
    %920 = vmatprep.subr.mxu0 %v810
    %921 = vmatpush1.msra.mxu0 %v809
    %922 = vmatprep.subr.mxu0 %v814
    %923 = vmatpush1.msra.mxu0 %v813
    %924 = vmatprep.subr.mxu0 0.0
    %925 = vmatpush1.msra.mxu0 0.0
    %926 = vmatprep.subr.mxu0 0.0
    %927 = vmatpush1.msra.mxu0 0.0
    %928 = vmatprep.subr.mxu0 0.0
    %929 = vmatpush1.msra.mxu0 0.0
    %930 = vmatprep.subr.mxu0 0.0
    %931 = vmatpush1.msra.mxu0 0.0
    %932 = vmatprep.subr.mxu0 0.0
    %933 = vmatpush1.msra.mxu0 0.0
    %934 = vmatprep.subr.mxu0 0.0
    %935 = vmatpush1.msra.mxu0 0.0
    %936 = vmatprep.subr.mxu0 0.0
    %937 = vmatpush1.msra.mxu0 0.0
    %938 = vmatprep.subr.mxu0 0.0
    %939 = vmatpush1.msra.mxu0 0.0
    %940 = vmatprep.subr.mxu0 0.0
    %941 = vmatpush1.msra.mxu0 0.0
    %942 = vmatprep.subr.mxu0 0.0
    %943 = vmatpush1.msra.mxu0 0.0
    %944 = vmatprep.subr.mxu0 0.0
    %945 = vmatpush1.msra.mxu0 0.0
    %946 = vmatprep.subr.mxu0 0.0
    %947 = vmatpush1.msra.mxu0 0.0
    %948 = vmatprep.subr.mxu0 0.0
    %949 = vmatpush1.msra.mxu0 0.0
    %950 = vmatprep.subr.mxu0 0.0
    %951 = vmatpush1.msra.mxu0 0.0
    %952 = vmatprep.subr.mxu0 0.0
    %953 = vmatpush1.msra.mxu0 0.0
    %954 = vmatprep.subr.mxu0 0.0
    %955 = vmatpush1.msra.mxu0 0.0
    %956 = vmatprep.subr.mxu0 0.0
    %957 = vmatpush1.msra.mxu0 0.0
    %958 = vmatprep.subr.mxu0 0.0
    %959 = vmatpush1.msra.mxu0 0.0
    %960 = vmatprep.subr.mxu0 0.0
    %961 = vmatpush1.msra.mxu0 0.0
    %962 = vmatprep.subr.mxu0 0.0
    %963 = vmatpush1.msra.mxu0 0.0
    %964 = vmatprep.subr.mxu0 0.0
    %965 = vmatpush1.msra.mxu0 0.0
    %966 = vmatprep.subr.mxu0 0.0
    %967 = vmatpush1.msra.mxu0 0.0
    %968 = vmatprep.subr.mxu0 0.0
    %969 = vmatpush1.msra.mxu0 0.0
    %970 = vmatprep.subr.mxu0 0.0
    %971 = vmatpush1.msra.mxu0 0.0
    %972 = vmatprep.subr.mxu0 0.0
    %973 = vmatpush1.msra.mxu0 0.0
    %974 = vmatprep.subr.mxu0 0.0
    %975 = vmatpush1.msra.mxu0 0.0
    %976 = vmatprep.subr.mxu0 0.0
    %977 = vmatpush1.msra.mxu0 0.0
    %978 = vmatprep.subr.mxu0 0.0
    %979 = vmatpush1.msra.mxu0 0.0
    %980 = vmatprep.mubr.f32.mxu0 0.0
    %981 = vmatmul.mubr.f32.gmra.mrb[0].mxu0 %v816
    %v982 = vpop.f32.mrb[0].mxu0
    %v983 = vadd.f32 0.0, %v982
    %v984 = vpop.f32.mrb[0].mxu0
    %v985 = vadd.f32 0.0, %v984
    %986 = vmatprep.mubr.f32.mxu0 0.0
    %987 = vmatmul.mubr.f32.gmra.mrb[0].mxu0 %v819
    %v988 = vpop.f32.mrb[0].mxu0
    %v989 = vadd.f32 0.0, %v988
    %v990 = vpop.f32.mrb[0].mxu0
    %v991 = vadd.f32 0.0, %v990
    %992 = vmatprep.mubr.f32.mxu0 0.0
    %993 = vmatmul.mubr.f32.gmra.mrb[0].mxu0 %v822
    %v994 = vpop.f32.mrb[0].mxu0
    %v995 = vadd.f32 0.0, %v994
    %v996 = vpop.f32.mrb[0].mxu0
    %v997 = vadd.f32 0.0, %v996
    %998 = vmatprep.mubr.f32.mxu0 0.0
    %999 = vmatmul.mubr.f32.gmra.mrb[0].mxu0 %v825
    %v1000 = vpop.f32.mrb[0].mxu0
    %v1001 = vadd.f32 0.0, %v1000
    %v1002 = vpop.f32.mrb[0].mxu0
    %v1003 = vadd.f32 0.0, %v1002
    %1004 = vdwg.mxu0
    %v1005 = vmul.f32 %v894, %v983
    %v1006 = vmul.f32 %v896, %v985
    %v1007 = vmul.f32 %v900, %v989
    %v1008 = vmul.f32 %v902, %v991
    %v1009 = vmul.f32 %v906, %v995
    %v1010 = vmul.f32 %v908, %v997
    %v1011 = vmul.f32 %v912, %v1001
    %v1012 = vmul.f32 %v914, %v1003
    %v1013 = vmul.f32 %v35, %v1005
    %v1014 = vmul.f32 %v36, %v1006
    %v1015 = vmul.f32 %v37, %v1007
    %v1016 = vmul.f32 %v38, %v1008
    %v1017 = vmul.f32 %v39, %v1009
    %v1018 = vmul.f32 %v40, %v1010
    %v1019 = vmul.f32 %v41, %v1011
    %v1020 = vmul.f32 %v42, %v1012
    %1021 = vst [vmem:[#allocation5] sm:$0xff] %v1013
    %1022 = vst [vmem:[#allocation5 + $0x8] sm:$0xff] %v1014
    %1023 = vst [vmem:[#allocation5 + $0x10] sm:$0xff] %v1015
    %1024 = vst [vmem:[#allocation5 + $0x18] sm:$0xff] %v1016
    %1025 = vst [vmem:[#allocation5 + $0x20] sm:$0xff] %v1017
    %1026 = vst [vmem:[#allocation5 + $0x28] sm:$0xff] %v1018
    %1027 = vst [vmem:[#allocation5 + $0x30] sm:$0xff] %v1019
    %1028 = vst [vmem:[#allocation5 + $0x38] sm:$0xff] %v1020
    // Predicated region
    $region26: #{tpu_custom_call.1} parent=1 // pred_check
      _
    $region27: #{tpu_custom_call.1} parent=1 // pred_check_branch
      %1030 = sbr.rel (0) target = $region29
    $region28: #{tpu_custom_call.1} parent=1 // pred_region
      %s1032 = ssub.s32 1024, 1024
      %1033 = vsyncadd [#allocation4], %s1032
      %s1034 = sshll.u32 [#allocation5], 4
      %s1035 = int_to_ptr.vmem [resolvable:$true] %s1034
      %1040 = dma.vmem_to_hbm [thread:$0]  %s1035, 1024, %s5, [#allocation4], 256, 256, 16
    $region29: #{tpu_custom_call.1} parent=1 // pred_fallthru
      _
    // Predicated region
    $region30: #{tpu_custom_call.1} parent=1 // pred_check
      _
    $region31: #{tpu_custom_call.1} parent=1 // pred_check_branch
      %1042 = sbr.rel (0) target = $region33
    $region32: #{tpu_custom_call.1} parent=1 // pred_region
      %1043 = dma.done [#allocation4], 1024
    $region33: #{tpu_custom_call.1} parent=1 // pred_fallthru
      _
    %1044 = vsyncpa [#allocation3], 1
    %1045 = vsyncpa [#allocation4], 1

</llo_original>
